<compile_context>
chip_gen: v7x
topology: tpu7x:2x2x1
jax: 0.10.0
libtpu: 0.0.40
codegen_flags: <defaults>
</compile_context>

<pallas_src>
import math

import jax
import jax.numpy as jnp
from jax.experimental import pallas as pl
from jax.experimental.pallas import tpu as pltpu

_A = math.sqrt(2.0 / math.pi)   # sqrt(2/pi), same constant as gelu_accurate._a
_B = 0.044715 * _A              # fold: A*(x + 0.044715*x^3) == x*(A + B*x^2)


def _gelu_acc_kernel(x_ref, o_ref):
    # Elementwise hot path: 0.5*x*(1 + tanh(x*(A + B*x^2)))
    x = x_ref[...].astype(jnp.float32)
    t = jnp.tanh(x * (_A + _B * (x * x)))        # tanh -> EUP slot (free-ish)
    o_ref[...] = (0.5 * x * (1.0 + t)).astype(o_ref.dtype)


def _cdiv(a, b):
    return -(-a // b)


def _round_up(a, b):
    return _cdiv(a, b) * b


def _sublane(dtype):
    """Native sublane tile for the dtype: 8 (f32), 16 (bf16/f16), 32 (1-byte)."""
    size = jnp.dtype(dtype).itemsize
    if size >= 4:
        return 8
    if size == 2:
        return 16
    return 32


def _default_block_bytes():
    """Generation-aware block-byte target: ~VMEM/16, clamped to [2, 8] MiB."""
    cap = None
    try:
        info = pltpu.get_tpu_info()
        cap = getattr(info, "vmem_capacity_bytes", None)
    except Exception:
        cap = None
    if not cap:
        cap = 128 << 20          # conservative fallback (v5e/v6e physical)
    return int(min(max(int(cap) // 16, 2 << 20), 8 << 20))


def _vmem_limit_bytes(block_bytes):
    """2 buffers x (in + out) per block, plus headroom; capped for v7x."""
    return int(min(max(32 << 20, 4 * block_bytes + (16 << 20)), 64 << 20))


def _choose_lane_width(n, sublane):
    """Pick a lane width C (multiple of 128) dividing n exactly.

    Prefer a C that also yields >= `sublane` rows (fills vreg sublanes).
    Returns None if no multiple-of-128 divisor exists (ragged total size)."""
    for c in (2048, 1024, 512, 256, 128):
        if n % c == 0 and n // c >= sublane:
            return c
    for c in (2048, 1024, 512, 256, 128):
        if n % c == 0:
            return c
    return None


def _row_tile(R, C, itemsize, sublane, target_block_bytes):
    """Row tile for the [R, C] slab (multiple of the dtype sublane)."""
    if R <= sublane:
        return R                                   # single full block is legal
    row_bytes = C * itemsize
    # Byte-targeted tile.
    tr_bytes = max(sublane, (target_block_bytes // row_bytes) // sublane * sublane)
    # v7x megacore balance: aim for ~8 roughly equal blocks, but never shrink
    # blocks below ~2 MiB (keeps the ~0.35 us/step overhead negligible on
    # single-TC v5e/v6e).
    tr_balance = _round_up(_cdiv(R, 8), sublane)
    rows_2mib = _round_up(_cdiv(2 << 20, row_bytes), sublane)
    tr = min(tr_bytes, max(tr_balance, rows_2mib))
    tr = min(tr, _round_up(R, sublane))            # don't vastly exceed the array
    return max(tr, sublane)


def gelu_acc(x, *, target_block_bytes=None):
    """Apply accurate (tanh) GELU elementwise via a Pallas TPU kernel."""
    orig_shape = x.shape
    dtype = x.dtype
    n = x.size
    if n == 0:
        return x

    itemsize = jnp.dtype(dtype).itemsize
    sublane = _sublane(dtype)
    if target_block_bytes is None:
        target_block_bytes = _default_block_bytes()

    cost = pl.CostEstimate(
        flops=int(7 * n), transcendentals=int(n),
        bytes_accessed=int(2 * n * itemsize))

    C = _choose_lane_width(n, sublane)

    if C is not None:
        # --- Aligned path: free reshape to a lane-dense [R, C] slab. -------
        R = n // C
        tr = _row_tile(R, C, itemsize, sublane, target_block_bytes)
        grid = (pl.cdiv(R, tr),)                   # ragged last block masked
        block_bytes = tr * C * itemsize

        out2 = pl.pallas_call(
            _gelu_acc_kernel,
            out_shape=jax.ShapeDtypeStruct((R, C), dtype),
            grid_spec=pltpu.PrefetchScalarGridSpec(
                num_scalar_prefetch=0,
                grid=grid,
                in_specs=[pl.BlockSpec((tr, C), lambda i: (i, 0))],
                out_specs=pl.BlockSpec((tr, C), lambda i: (i, 0)),
            ),
            compiler_params=pltpu.CompilerParams(
                dimension_semantics=("parallel",),
                vmem_limit_bytes=_vmem_limit_bytes(block_bytes),
            ),
            cost_estimate=cost,
        )(x.reshape(R, C))
        return out2.reshape(orig_shape)

    # --- Ragged path: run directly on the 1-D flat array (no pad/slice). ---
    flat = x.reshape(-1)
    # Block = multiple of 4096 elements (covers the native tile for every
    # dtype down to 1 byte); Pallas masks the ragged last block.
    elems_per_block = max(4096, (target_block_bytes // itemsize) // 4096 * 4096)
    if n <= elems_per_block:
        blk = n                                    # full array -> always legal
        grid = (1,)
    else:
        blk = elems_per_block
        grid = (pl.cdiv(n, blk),)
    block_bytes = blk * itemsize

    out_flat = pl.pallas_call(
        _gelu_acc_kernel,
        out_shape=jax.ShapeDtypeStruct((n,), dtype),
        grid_spec=pltpu.PrefetchScalarGridSpec(
            num_scalar_prefetch=0,
            grid=grid,
            in_specs=[pl.BlockSpec((blk,), lambda i: (i,))],
            out_specs=pl.BlockSpec((blk,), lambda i: (i,)),
        ),
        compiler_params=pltpu.CompilerParams(
            dimension_semantics=("parallel",),
            vmem_limit_bytes=_vmem_limit_bytes(block_bytes),
        ),
        cost_estimate=cost,
    )(flat)
    return out_flat.reshape(orig_shape)


def gelu_acc_reference(x):
    # Pure-JAX reference mirroring the PyTorch gelu_accurate.
    xf = x.astype(jnp.float32)
    y = 0.5 * xf * (1.0 + jnp.tanh(_A * (xf + 0.044715 * jnp.power(xf, 3))))
    return y.astype(x.dtype)


if __name__ == "__main__":
    key = jax.random.PRNGKey(0)
    k0, k1, k2, k3 = jax.random.split(key, 4)

    # NCHW-shaped example, consistent with typical module input.
    x = jax.random.normal(k0, (2, 4, 16, 16), dtype=jnp.float32)
    y = jax.block_until_ready(gelu_acc(x))
    y_ref = gelu_acc_reference(x)
    assert y.shape == x.shape and y.dtype == x.dtype
    assert jnp.allclose(y, y_ref, atol=1e-5, rtol=1e-5)

    # Exercise the masked ragged row-block path (R not a multiple of tr).
    x_b = jax.random.normal(k1, (2, 3, 40, 40), dtype=jnp.float32)
    y_b = jax.block_until_ready(gelu_acc(x_b))
    assert jnp.allclose(y_b, gelu_acc_reference(x_b), atol=1e-5, rtol=1e-5)

    # Exercise the ragged-total-size 1-D path (no multiple-of-128 divisor).
    x_c = jax.random.normal(k2, (3, 5, 7), dtype=jnp.float32)
    y_c = jax.block_until_ready(gelu_acc(x_c))
    assert y_c.shape == x_c.shape
    assert jnp.allclose(y_c, gelu_acc_reference(x_c), atol=1e-5, rtol=1e-5)

    # Exercise dtype-aware (16, 128) tiling for bf16.
    x_d = jax.random.normal(k3, (4, 8, 64), dtype=jnp.bfloat16)
    y_d = jax.block_until_ready(gelu_acc(x_d))
    assert y_d.shape == x_d.shape and y_d.dtype == x_d.dtype
    assert jnp.allclose(y_d.astype(jnp.float32),
                        gelu_acc_reference(x_d).astype(jnp.float32),
                        atol=2e-2, rtol=2e-2)

    print("KERNEL_OK")
</pallas_src>

<mosaic_0001>
module attributes {stable_mosaic.version = 11 : i64} {
  func.func @_gelu_acc_kernel(%arg0: i32, %arg1: memref<8x256xf32, #tpu.memory_space<vmem>>, %arg2: memref<8x256xf32, #tpu.memory_space<vmem>>) attributes {dimension_semantics = [#tpu.dimension_semantics<parallel>], iteration_bounds = array<i64: 1>, scalar_prefetch = 0 : i64, scratch_operands = 0 : i64, tpu.core_type = #tpu.core_type<tc>, window_params = [{transform_indices = @transform_0, window_bounds = array<i64: 8, 256>}, {transform_indices = @transform_1, window_bounds = array<i64: 8, 256>}]} {
    %c0 = arith.constant 0 : index
    %c0_0 = arith.constant 0 : index
    %0 = vector.load %arg1[%c0, %c0_0] : memref<8x256xf32, #tpu.memory_space<vmem>>, vector<8x256xf32>
    %1 = arith.mulf %0, %0 : vector<8x256xf32>
    %cst = arith.constant 0.0356774069 : f32
    %2 = vector.broadcast %cst : f32 to vector<8x256xf32>
    %3 = arith.mulf %2, %1 : vector<8x256xf32>
    %cst_1 = arith.constant 0.797884583 : f32
    %4 = vector.broadcast %cst_1 : f32 to vector<8x256xf32>
    %5 = arith.addf %4, %3 : vector<8x256xf32>
    %6 = arith.mulf %0, %5 : vector<8x256xf32>
    %7 = math.tanh %6 : vector<8x256xf32>
    %cst_2 = arith.constant 5.000000e-01 : f32
    %8 = vector.broadcast %cst_2 : f32 to vector<8x256xf32>
    %9 = arith.mulf %8, %0 : vector<8x256xf32>
    %cst_3 = arith.constant 1.000000e+00 : f32
    %10 = vector.broadcast %cst_3 : f32 to vector<8x256xf32>
    %11 = arith.addf %10, %7 : vector<8x256xf32>
    %12 = arith.mulf %9, %11 : vector<8x256xf32>
    %c0_4 = arith.constant 0 : index
    %c0_5 = arith.constant 0 : index
    %13 = vector.load %arg2[%c0_4, %c0_5] : memref<8x256xf32, #tpu.memory_space<vmem>>, vector<8x256xf32>
    tpu.vector_store %arg2[%c0_4, %c0_5], %12 {strides = array<i32>} : memref<8x256xf32, #tpu.memory_space<vmem>>, vector<8x256xf32>,
    return
  }
  func.func @transform_0(%arg0: i32) -> (i32, i32) {
    %c0_i32 = arith.constant 0 : i32
    %c0_i32_0 = arith.constant 0 : i32
    return %arg0, %c0_i32 : i32, i32
  }
  func.func @transform_1(%arg0: i32) -> (i32, i32) {
    %c0_i32 = arith.constant 0 : i32
    %c0_i32_0 = arith.constant 0 : i32
    return %arg0, %c0_i32 : i32, i32
  }
}

</mosaic_0001>

<llo_original>
// kernel: tpu_custom_call.1
$region0: #{tpu_custom_call.1}
  #allocation0 [shape = 'u32[]', space=smem, size = 0x4, offset = 0x4, fixed_abs, tag = 'smem constant byte address 0x4 - core index']
  #allocation1 [shape = 'u32[144,128]{1,0:T(1,128)}', space=vmem, size = 0x12000, scoped, tag = 'internal scratch']
  %s0 = inlined_call_operand.hbm [shape: f32[8,256], index: 0, kind: input, shape index: {}]
  %s1 = inlined_call_operand.hbm [shape: f32[8,256], index: 1, kind: output, shape index: {}]
  %s2 = sld [smem:[#allocation0]]
  $region18: #{tpu_custom_call.1} parent=0
    _
  %s4 = ssub.s32 1, %s2
  %s5 = scalar_select 0, %s4, %s2
  $region1: #{tpu_custom_call.1} parent=0
    #allocation2 [shape = 'u8[8192]{0}', space=vmem, size = 0x2000, scoped, tag = 'input window, operand 0, single buffered']
    #allocation3 [shape = 's32[1]{0}', space=sflag, size = 0x4, scoped, tag = 'scoped memory for tpu_custom_call.1']
    #allocation4 [shape = 's32[1]{0}', space=sflag, size = 0x4, scoped, tag = 'scoped memory for tpu_custom_call.1']
    #allocation5 [shape = 'u8[8192]{0}', space=vmem, size = 0x2000, scoped, tag = 'output window, operand 0, single buffered']
    %6 = vsyncpa [#allocation3], 0
    %7 = vsyncpa [#allocation4], 0
    // Predicated region
    $region2: #{tpu_custom_call.1} parent=1 // pred_check
      _
    $region3: #{tpu_custom_call.1} parent=1 // pred_check_branch
      %9 = sbr.rel (0) target = $region5
    $region4: #{tpu_custom_call.1} parent=1 // pred_region
      %s11 = ssub.s32 256, 256
      %12 = vsyncadd [#allocation3], %s11
      %s14 = sshll.u32 [#allocation2], 4
      %s15 = int_to_ptr.vmem [resolvable:$true] %s14
      %17 = dma.hbm_to_vmem [thread:$0]  %s0, 256, %s15, [#allocation3]
    $region5: #{tpu_custom_call.1} parent=1 // pred_fallthru
      _
    // Predicated region
    $region6: #{tpu_custom_call.1} parent=1 // pred_check
      _
    $region7: #{tpu_custom_call.1} parent=1 // pred_check_branch
      %19 = sbr.rel (0) target = $region9
    $region8: #{tpu_custom_call.1} parent=1 // pred_region
      %20 = dma.done [#allocation3], 256
    $region9: #{tpu_custom_call.1} parent=1 // pred_fallthru
      _
    %v21 = vld [vmem:[#allocation2] sm:$0xff]
    %v22 = vld [vmem:[#allocation2 + $0x8] sm:$0xff]
    %v23 = vmul.f32 %v21, %v21
    %v24 = vmul.f32 %v22, %v22
    %v25 = vmul.f32 %v23, 0.035677407
    %v26 = vmul.f32 %v24, 0.035677407
    %v27 = vadd.f32 %v25, 0.7978846
    %v28 = vadd.f32 %v26, 0.7978846
    %v29 = vmul.f32 %v21, %v27
    %v30 = vmul.f32 %v22, %v28
    %v31 = vtanh.pop %v29
    %v32 = vtanh.pop %v30
    %v33 = vmul.f32 %v21, 0.5
    %v34 = vmul.f32 %v22, 0.5
    %v35 = vadd.f32 %v31, 1.0
    %v36 = vadd.f32 %v32, 1.0
    %v37 = vmul.f32 %v33, %v35
    %v38 = vmul.f32 %v34, %v36
    %39 = vst [vmem:[#allocation5] sm:$0xff] %v37
    %40 = vst [vmem:[#allocation5 + $0x8] sm:$0xff] %v38
    // Predicated region
    $region10: #{tpu_custom_call.1} parent=1 // pred_check
      _
    $region11: #{tpu_custom_call.1} parent=1 // pred_check_branch
      %42 = sbr.rel (0) target = $region13
    $region12: #{tpu_custom_call.1} parent=1 // pred_region
      %s44 = ssub.s32 256, 256
      %45 = vsyncadd [#allocation4], %s44
      %s47 = sshll.u32 [#allocation5], 4
      %s48 = int_to_ptr.vmem [resolvable:$true] %s47
      %50 = dma.vmem_to_hbm [thread:$0]  %s48, 256, %s1, [#allocation4]
    $region13: #{tpu_custom_call.1} parent=1 // pred_fallthru
      _
    // Predicated region
    $region14: #{tpu_custom_call.1} parent=1 // pred_check
      _
    $region15: #{tpu_custom_call.1} parent=1 // pred_check_branch
      %52 = sbr.rel (0) target = $region17
    $region16: #{tpu_custom_call.1} parent=1 // pred_region
      %53 = dma.done [#allocation4], 256
    $region17: #{tpu_custom_call.1} parent=1 // pred_fallthru
      _
    %54 = vsyncpa [#allocation3], 1
    %55 = vsyncpa [#allocation4], 1

</llo_original>
